<compile_context>
chip_gen: v5e
topology: v5e:2x2
jax: 0.10.0
libtpu: 0.0.40
codegen_flags: <defaults>
</compile_context>

<pallas_src>
import functools
import math

import jax
import jax.numpy as jnp
import numpy as np
from jax.experimental import pallas as pl
from jax.experimental.pallas import tpu as pltpu

DP = 128   # padded feature width = one full lane tile


def _attend(q, k, v, attn_bias):
    """softmax(q k^T + attn_bias) v over the flattened (B*N, Dp) slab.

    attn_bias is a block-diagonal additive mask (0 within a batch, -1e30
    across batches): one score matmul replaces B per-batch matmuls and the
    sublane concatenate of the previous version.  Softmax / mask math stays
    f32; only MXU operands are bf16 (f32 accumulation).
    """
    s = jax.lax.dot_general(
        q.astype(jnp.bfloat16), k.astype(jnp.bfloat16),
        dimension_numbers=(((1,), (1,)), ((), ())),     # q @ k^T, no relayout
        preferred_element_type=jnp.float32)
    s = s + attn_bias
    m = jnp.max(s, axis=-1, keepdims=True)
    e = jnp.exp(s - m)
    denom = jnp.sum(e, axis=-1, keepdims=True)
    attn = e * pl.reciprocal(denom, approx=True)        # EUP slot, not a VALU divide
    return jnp.dot(attn.astype(jnp.bfloat16), v.astype(jnp.bfloat16),
                   preferred_element_type=jnp.float32)


def drn_kernel(x_ref, w_ref, b_ref, abias_ref, out_ref, *, theta, dp):
    x = x_ref[...]                                      # (BN, Dp) f32, lane-dense
    xh = x.astype(jnp.bfloat16)                         # MXU operand
    xl = (x - xh.astype(jnp.float32)).astype(jnp.bfloat16)  # residual for bf16x3 head

    bias = b_ref[...]                                   # (8, Dp) f32, single DMA
    bd1, bdiff, bm = bias[0:1, :], bias[1:2, :], bias[2:3, :]
    abias = abias_ref[...]                              # (BN, BN) additive batch mask

    # One fused projection of x: [d1 | diff_hi | diff_lo | q1 | k1 | v1].
    y = jnp.dot(xh, w_ref[:, :6 * dp], preferred_element_type=jnp.float32)

    d1 = y[:, 0:dp] + bd1                               # d_x1(x), reused 3x

    # Threshold head (d_x1 - d_x2): bf16x3-style split (xh@wh + xh@wl + xl@wh)
    # keeps the strict `< theta` compare accurate without an f32xf32 MXU matmul.
    diff = (y[:, dp:2 * dp] + y[:, 2 * dp:3 * dp]
            + jnp.dot(xl, w_ref[:, dp:2 * dp], preferred_element_type=jnp.float32)
            + bdiff)
    ut = (diff < theta).astype(jnp.float32)

    # Attention 1: ca(x, x); the 1/sqrt(D) scale is folded into the wq column.
    x1 = ut * _attend(y[:, 3 * dp:4 * dp], y[:, 4 * dp:5 * dp],
                      y[:, 5 * dp:6 * dp], abias)

    # Attention 2: ca(d_x1(x), x1); K/V projections fused into one matmul.
    q2 = jnp.dot(d1.astype(jnp.bfloat16), w_ref[:, 3 * dp:4 * dp],
                 preferred_element_type=jnp.float32)
    kv2 = jnp.dot(x1.astype(jnp.bfloat16), w_ref[:, 4 * dp:6 * dp],
                  preferred_element_type=jnp.float32)
    sa = _attend(q2, kv2[:, :dp], kv2[:, dp:], abias)

    # out = mlp(sa) + d_x1(x)
    out = (jnp.dot(sa.astype(jnp.bfloat16), w_ref[:, 6 * dp:7 * dp],
                   preferred_element_type=jnp.float32)
           + bm + d1)
    # TODO(synk): emit bf16 here if the downstream consumer tolerates it
    # (halves output store/HBM-writeback bytes).
    out_ref[...] = out.astype(out_ref.dtype)


def prepare_params(params, d):
    """One-time weight prep, hoisted out of the per-forward path.

    * d_x2 folded into a difference head, split into bf16 hi/lo components.
    * 1/sqrt(D) attention scale folded into wq.
    * All MXU weights bf16, zero-padded to lane-dense (128,128) tiles and packed
      into one (128, 7*128) slab: [wd1 | wdiff_hi | wdiff_lo | wq*s | wk | wv | wm].
    * The three bias rows packed into one (8, 128) f32 slab (single DMA,
      unmasked loads).
    """
    scale = 1.0 / math.sqrt(d)
    wdiff = params["wd1"] - params["wd2"]
    wdiff_hi = wdiff.astype(jnp.bfloat16)
    wdiff_lo = (wdiff - wdiff_hi.astype(jnp.float32)).astype(jnp.bfloat16)

    def pad_w(w):
        return jnp.zeros((DP, DP), jnp.bfloat16).at[:d, :d].set(w.astype(jnp.bfloat16))

    wbig = jnp.concatenate(
        [pad_w(params["wd1"]), pad_w(wdiff_hi), pad_w(wdiff_lo),
         pad_w(params["wq"] * scale), pad_w(params["wk"]), pad_w(params["wv"]),
         pad_w(params["wm"])], axis=1)                        # (128, 896) bf16

    bias = jnp.zeros((8, DP), jnp.float32)
    bias = bias.at[0, :d].set(params["bd1"].reshape(-1))
    bias = bias.at[1, :d].set((params["bd1"] - params["bd2"]).reshape(-1))
    bias = bias.at[2, :d].set(params["bm"].reshape(-1))
    return {"wbig": wbig, "bias": bias}


def drn_forward(x, prep, theta):
    B, N, D = x.shape
    BN = B * N

    # Lane-dense input: zero-pad the feature axis to 128 so the out_spec and
    # every intermediate use full vregs / unmasked stores.
    xpad = jnp.zeros((BN, DP), jnp.float32).at[:, :D].set(
        x.reshape(BN, D).astype(jnp.float32))

    # Block-diagonal additive mask: rows of different batches must not attend
    # to each other once the batch is flattened into one slab.
    bidx = np.repeat(np.arange(B), N)
    abias = jnp.asarray(
        np.where(bidx[:, None] == bidx[None, :], 0.0, -1e30).astype(np.float32))

    kernel = functools.partial(drn_kernel, theta=float(theta), dp=DP)

    def full(rows, cols):
        return pl.BlockSpec((rows, cols), lambda i: (0, 0))

    out = pl.pallas_call(
        kernel,
        out_shape=jax.ShapeDtypeStruct((BN, DP), jnp.float32),
        grid=(1,),
        in_specs=[full(BN, DP),          # x, flattened + lane-padded (f32)
                  full(DP, 7 * DP),      # packed bf16 weight slab
                  full(8, DP),           # packed f32 bias slab
                  full(BN, BN)],         # additive block-diagonal batch mask
        out_specs=full(BN, DP),
        compiler_params=pltpu.CompilerParams(dimension_semantics=("arbitrary",)),
    )(xpad, prep["wbig"], prep["bias"], abias)

    # TODO(synk): for production BN/D add a 'parallel' row-grid axis with
    # VMEM-sized tiles (v7x: 64 MiB / 2 TensorCores), pl.Buffered(1) on the
    # grid-invariant weight/bias specs, and flash-style KV tiling.
    return out[:, :D].reshape(B, N, D)


def drn_reference(x, params, theta):
    """Pure-JAX f32 reference of the same forward semantics."""
    D = x.shape[-1]
    scale = 1.0 / math.sqrt(D)

    def ca(q_in, kv_in):
        q = q_in @ params["wq"]
        k = kv_in @ params["wk"]
        v = kv_in @ params["wv"]
        s = jnp.einsum("bnd,bmd->bnm", q, k) * scale
        a = jax.nn.softmax(s, axis=-1)
        return jnp.einsum("bnm,bmd->bnd", a, v)

    d1 = x @ params["wd1"] + params["bd1"]
    d2 = x @ params["wd2"] + params["bd2"]
    ut = ((d1 - d2) < theta).astype(jnp.float32)
    x1 = ut * ca(x, x)
    sa = ca(d1, x1)
    return sa @ params["wm"] + params["bm"] + d1


def make_params(key, D):
    # Weights stored as (in, out), i.e. pre-transposed relative to nn.Linear's
    # (out, in), so the kernel applies them as x @ W.
    ks = jax.random.split(key, 7)
    s = 1.0 / math.sqrt(D)
    return {
        "wd1": jax.random.uniform(ks[0], (D, D), jnp.float32, -s, s),
        "bd1": jax.random.uniform(ks[1], (1, D), jnp.float32, -s, s),
        "wd2": jax.random.uniform(ks[2], (D, D), jnp.float32, -s, s),
        "bd2": jnp.zeros((1, D), jnp.float32),
        "wq": jax.random.uniform(ks[3], (D, D), jnp.float32, -s, s),
        "wk": jax.random.uniform(ks[4], (D, D), jnp.float32, -s, s),
        "wv": jax.random.uniform(ks[5], (D, D), jnp.float32, -s, s),
        "wm": jax.random.uniform(ks[6], (D, D), jnp.float32, -s, s),
        "bm": jnp.zeros((1, D), jnp.float32),
    }


if __name__ == "__main__":
    B, N, D = 2, 8, 32      # batch, seq, feature (in_dim=out_dim=in_q_dim=hid_q_dim=D)
    theta = 0.1

    key = jax.random.PRNGKey(0)
    kx, kp = jax.random.split(key)
    x = jax.random.normal(kx, (B, N, D), jnp.float32)
    params = make_params(kp, D)

    # TODO(synk): d_x1 / d_x2 are opaque pretrained models ('pre_dmodel.pth');
    # they are modeled here as deterministic Linear(D, D) heads.
    prep = prepare_params(params, D)        # one-time, hoisted weight prep

    out = jax.block_until_ready(drn_forward(x, prep, theta))
    ref = drn_reference(x, params, theta)

    # bf16 MXU operands (f32 accumulation) + approximate-reciprocal softmax
    # loosen the tolerance vs the pure-f32 reference; the threshold mask path
    # uses a bf16x3 split so the binary mask matches the reference.
    if not np.allclose(np.asarray(out), np.asarray(ref), rtol=5e-2, atol=5e-2):
        raise AssertionError("Pallas DRN output mismatch vs JAX reference")

    print("KERNEL_OK")
</pallas_src>

<mosaic_0001>
module attributes {stable_mosaic.version = 11 : i64} {
  func.func @drn_kernel(%arg0: i32, %arg1: memref<16x128xf32, #tpu.memory_space<vmem>>, %arg2: memref<128x896xbf16, #tpu.memory_space<vmem>>, %arg3: memref<8x128xf32, #tpu.memory_space<vmem>>, %arg4: memref<16x16xf32, #tpu.memory_space<vmem>>, %arg5: memref<16x128xf32, #tpu.memory_space<vmem>>) attributes {dimension_semantics = [#tpu.dimension_semantics<arbitrary>], iteration_bounds = array<i64: 1>, scalar_prefetch = 0 : i64, scratch_operands = 0 : i64, tpu.core_type = #tpu.core_type<tc>, window_params = [{pipeline_mode = #tpu.pipeline_mode<synchronous>, transform_indices = @transform_0, window_bounds = array<i64: 16, 128>}, {pipeline_mode = #tpu.pipeline_mode<synchronous>, transform_indices = @transform_1, window_bounds = array<i64: 128, 896>}, {pipeline_mode = #tpu.pipeline_mode<synchronous>, transform_indices = @transform_2, window_bounds = array<i64: 8, 128>}, {pipeline_mode = #tpu.pipeline_mode<synchronous>, transform_indices = @transform_3, window_bounds = array<i64: 16, 16>}, {pipeline_mode = #tpu.pipeline_mode<synchronous>, transform_indices = @transform_4, window_bounds = array<i64: 16, 128>}]} {
    %c0 = arith.constant 0 : index
    %c0_0 = arith.constant 0 : index
    %0 = vector.load %arg1[%c0, %c0_0] : memref<16x128xf32, #tpu.memory_space<vmem>>, vector<16x128xf32>
    %1 = arith.truncf %0 : vector<16x128xf32> to vector<16x128xbf16>
    %2 = arith.extf %1 : vector<16x128xbf16> to vector<16x128xf32>
    %3 = arith.subf %0, %2 : vector<16x128xf32>
    %4 = arith.truncf %3 : vector<16x128xf32> to vector<16x128xbf16>
    %c0_1 = arith.constant 0 : index
    %c0_2 = arith.constant 0 : index
    %5 = vector.load %arg3[%c0_1, %c0_2] : memref<8x128xf32, #tpu.memory_space<vmem>>, vector<8x128xf32>
    %6 = vector.extract_strided_slice %5 {offsets = [0, 0], sizes = [1, 128], strides = [1, 1]} : vector<8x128xf32> to vector<1x128xf32>
    %7 = vector.extract_strided_slice %5 {offsets = [1, 0], sizes = [1, 128], strides = [1, 1]} : vector<8x128xf32> to vector<1x128xf32>
    %8 = vector.extract_strided_slice %5 {offsets = [2, 0], sizes = [1, 128], strides = [1, 1]} : vector<8x128xf32> to vector<1x128xf32>
    %c0_3 = arith.constant 0 : index
    %c0_4 = arith.constant 0 : index
    %9 = vector.load %arg4[%c0_3, %c0_4] : memref<16x16xf32, #tpu.memory_space<vmem>>, vector<16x16xf32>
    %c0_5 = arith.constant 0 : index
    %c0_6 = arith.constant 0 : index
    %10 = vector.load %arg2[%c0_5, %c0_6] : memref<128x896xbf16, #tpu.memory_space<vmem>>, vector<128x768xbf16>
    %cst = arith.constant dense<0.000000e+00> : vector<16x768xf32>
    %11 = tpu.matmul %1, %10, %cst {dimension_numbers = #tpu.dot_dimension_numbers<[1], [0], [0], [1], [0, 0, 1, 1], [], []>} : vector<16x128xbf16>, vector<128x768xbf16>, vector<16x768xf32> -> vector<16x768xf32>
    %12 = vector.extract_strided_slice %11 {offsets = [0, 0], sizes = [16, 128], strides = [1, 1]} : vector<16x768xf32> to vector<16x128xf32>
    %13 = vector.broadcast %6 : vector<1x128xf32> to vector<16x128xf32>
    %14 = arith.addf %12, %13 : vector<16x128xf32>
    %15 = vector.extract_strided_slice %11 {offsets = [0, 128], sizes = [16, 128], strides = [1, 1]} : vector<16x768xf32> to vector<16x128xf32>
    %16 = vector.extract_strided_slice %11 {offsets = [0, 256], sizes = [16, 128], strides = [1, 1]} : vector<16x768xf32> to vector<16x128xf32>
    %17 = arith.addf %15, %16 : vector<16x128xf32>
    %c0_7 = arith.constant 0 : index
    %c128 = arith.constant 128 : index
    %18 = vector.load %arg2[%c0_7, %c128] : memref<128x896xbf16, #tpu.memory_space<vmem>>, vector<128x128xbf16>
    %cst_8 = arith.constant dense<0.000000e+00> : vector<16x128xf32>
    %19 = tpu.matmul %4, %18, %cst_8 {dimension_numbers = #tpu.dot_dimension_numbers<[1], [0], [0], [1], [0, 0, 1, 1], [], []>} : vector<16x128xbf16>, vector<128x128xbf16>, vector<16x128xf32> -> vector<16x128xf32>
    %20 = arith.addf %17, %19 : vector<16x128xf32>
    %21 = vector.broadcast %7 : vector<1x128xf32> to vector<16x128xf32>
    %22 = arith.addf %20, %21 : vector<16x128xf32>
    %cst_9 = arith.constant 1.000000e-01 : f32
    %23 = vector.broadcast %cst_9 : f32 to vector<16x128xf32>
    %24 = arith.cmpf olt, %22, %23 : vector<16x128xf32>
    %25 = arith.extui %24 : vector<16x128xi1> to vector<16x128xi32>
    %26 = arith.sitofp %25 : vector<16x128xi32> to vector<16x128xf32>
    %27 = vector.extract_strided_slice %11 {offsets = [0, 384], sizes = [16, 128], strides = [1, 1]} : vector<16x768xf32> to vector<16x128xf32>
    %28 = vector.extract_strided_slice %11 {offsets = [0, 512], sizes = [16, 128], strides = [1, 1]} : vector<16x768xf32> to vector<16x128xf32>
    %29 = vector.extract_strided_slice %11 {offsets = [0, 640], sizes = [16, 128], strides = [1, 1]} : vector<16x768xf32> to vector<16x128xf32>
    %30 = arith.truncf %27 : vector<16x128xf32> to vector<16x128xbf16>
    %31 = arith.truncf %28 : vector<16x128xf32> to vector<16x128xbf16>
    %cst_10 = arith.constant dense<0.000000e+00> : vector<16x16xf32>
    %32 = tpu.matmul %30, %31, %cst_10 {dimension_numbers = #tpu.dot_dimension_numbers<[1], [1], [0], [0], [0, 0, 1, 0], [], []>} : vector<16x128xbf16>, vector<16x128xbf16>, vector<16x16xf32> -> vector<16x16xf32>
    %33 = arith.addf %32, %9 : vector<16x16xf32>
    %cst_11 = arith.constant dense<0xFF800000> : vector<16xf32>
    %34 = vector.multi_reduction <maximumf>, %33, %cst_11 [1] : vector<16x16xf32> to vector<16xf32>
    %35 = vector.shape_cast %34 : vector<16xf32> to vector<16x1xf32>
    %36 = vector.broadcast %35 : vector<16x1xf32> to vector<16x16xf32>
    %37 = arith.subf %33, %36 : vector<16x16xf32>
    %38 = math.exp %37 : vector<16x16xf32>
    %cst_12 = arith.constant dense<0.000000e+00> : vector<16xf32>
    %39 = vector.multi_reduction <add>, %38, %cst_12 [1] : vector<16x16xf32> to vector<16xf32>
    %40 = vector.shape_cast %39 : vector<16xf32> to vector<16x1xf32>
    %41 = tpu.reciprocal %40 {approx = true} : vector<16x1xf32> -> vector<16x1xf32>
    %42 = vector.broadcast %41 : vector<16x1xf32> to vector<16x16xf32>
    %43 = arith.mulf %38, %42 : vector<16x16xf32>
    %44 = arith.truncf %43 : vector<16x16xf32> to vector<16x16xbf16>
    %45 = arith.truncf %29 : vector<16x128xf32> to vector<16x128xbf16>
    %cst_13 = arith.constant dense<0.000000e+00> : vector<16x128xf32>
    %46 = tpu.matmul %44, %45, %cst_13 {dimension_numbers = #tpu.dot_dimension_numbers<[1], [0], [0], [1], [0, 0, 1, 1], [], []>} : vector<16x16xbf16>, vector<16x128xbf16>, vector<16x128xf32> -> vector<16x128xf32>
    %47 = arith.mulf %26, %46 : vector<16x128xf32>
    %48 = arith.truncf %14 : vector<16x128xf32> to vector<16x128xbf16>
    %c0_14 = arith.constant 0 : index
    %c384 = arith.constant 384 : index
    %49 = vector.load %arg2[%c0_14, %c384] : memref<128x896xbf16, #tpu.memory_space<vmem>>, vector<128x128xbf16>
    %cst_15 = arith.constant dense<0.000000e+00> : vector<16x128xf32>
    %50 = tpu.matmul %48, %49, %cst_15 {dimension_numbers = #tpu.dot_dimension_numbers<[1], [0], [0], [1], [0, 0, 1, 1], [], []>} : vector<16x128xbf16>, vector<128x128xbf16>, vector<16x128xf32> -> vector<16x128xf32>
    %51 = arith.truncf %47 : vector<16x128xf32> to vector<16x128xbf16>
    %c0_16 = arith.constant 0 : index
    %c512 = arith.constant 512 : index
    %52 = vector.load %arg2[%c0_16, %c512] : memref<128x896xbf16, #tpu.memory_space<vmem>>, vector<128x256xbf16>
    %cst_17 = arith.constant dense<0.000000e+00> : vector<16x256xf32>
    %53 = tpu.matmul %51, %52, %cst_17 {dimension_numbers = #tpu.dot_dimension_numbers<[1], [0], [0], [1], [0, 0, 1, 1], [], []>} : vector<16x128xbf16>, vector<128x256xbf16>, vector<16x256xf32> -> vector<16x256xf32>
    %54 = vector.extract_strided_slice %53 {offsets = [0, 0], sizes = [16, 128], strides = [1, 1]} : vector<16x256xf32> to vector<16x128xf32>
    %55 = vector.extract_strided_slice %53 {offsets = [0, 128], sizes = [16, 128], strides = [1, 1]} : vector<16x256xf32> to vector<16x128xf32>
    %56 = arith.truncf %50 : vector<16x128xf32> to vector<16x128xbf16>
    %57 = arith.truncf %54 : vector<16x128xf32> to vector<16x128xbf16>
    %cst_18 = arith.constant dense<0.000000e+00> : vector<16x16xf32>
    %58 = tpu.matmul %56, %57, %cst_18 {dimension_numbers = #tpu.dot_dimension_numbers<[1], [1], [0], [0], [0, 0, 1, 0], [], []>} : vector<16x128xbf16>, vector<16x128xbf16>, vector<16x16xf32> -> vector<16x16xf32>
    %59 = arith.addf %58, %9 : vector<16x16xf32>
    %cst_19 = arith.constant dense<0xFF800000> : vector<16xf32>
    %60 = vector.multi_reduction <maximumf>, %59, %cst_19 [1] : vector<16x16xf32> to vector<16xf32>
    %61 = vector.shape_cast %60 : vector<16xf32> to vector<16x1xf32>
    %62 = vector.broadcast %61 : vector<16x1xf32> to vector<16x16xf32>
    %63 = arith.subf %59, %62 : vector<16x16xf32>
    %64 = math.exp %63 : vector<16x16xf32>
    %cst_20 = arith.constant dense<0.000000e+00> : vector<16xf32>
    %65 = vector.multi_reduction <add>, %64, %cst_20 [1] : vector<16x16xf32> to vector<16xf32>
    %66 = vector.shape_cast %65 : vector<16xf32> to vector<16x1xf32>
    %67 = tpu.reciprocal %66 {approx = true} : vector<16x1xf32> -> vector<16x1xf32>
    %68 = vector.broadcast %67 : vector<16x1xf32> to vector<16x16xf32>
    %69 = arith.mulf %64, %68 : vector<16x16xf32>
    %70 = arith.truncf %69 : vector<16x16xf32> to vector<16x16xbf16>
    %71 = arith.truncf %55 : vector<16x128xf32> to vector<16x128xbf16>
    %cst_21 = arith.constant dense<0.000000e+00> : vector<16x128xf32>
    %72 = tpu.matmul %70, %71, %cst_21 {dimension_numbers = #tpu.dot_dimension_numbers<[1], [0], [0], [1], [0, 0, 1, 1], [], []>} : vector<16x16xbf16>, vector<16x128xbf16>, vector<16x128xf32> -> vector<16x128xf32>
    %73 = arith.truncf %72 : vector<16x128xf32> to vector<16x128xbf16>
    %c0_22 = arith.constant 0 : index
    %c768 = arith.constant 768 : index
    %74 = vector.load %arg2[%c0_22, %c768] : memref<128x896xbf16, #tpu.memory_space<vmem>>, vector<128x128xbf16>
    %cst_23 = arith.constant dense<0.000000e+00> : vector<16x128xf32>
    %75 = tpu.matmul %73, %74, %cst_23 {dimension_numbers = #tpu.dot_dimension_numbers<[1], [0], [0], [1], [0, 0, 1, 1], [], []>} : vector<16x128xbf16>, vector<128x128xbf16>, vector<16x128xf32> -> vector<16x128xf32>
    %76 = vector.broadcast %8 : vector<1x128xf32> to vector<16x128xf32>
    %77 = arith.addf %75, %76 : vector<16x128xf32>
    %78 = arith.addf %77, %14 : vector<16x128xf32>
    %c0_24 = arith.constant 0 : index
    %c0_25 = arith.constant 0 : index
    %79 = vector.load %arg5[%c0_24, %c0_25] : memref<16x128xf32, #tpu.memory_space<vmem>>, vector<16x128xf32>
    tpu.vector_store %arg5[%c0_24, %c0_25], %78 {strides = array<i32>} : memref<16x128xf32, #tpu.memory_space<vmem>>, vector<16x128xf32>,
    return
  }
  func.func @transform_0(%arg0: i32) -> (i32, i32) {
    %c0_i32 = arith.constant 0 : i32
    %c0_i32_0 = arith.constant 0 : i32
    %c0_i32_1 = arith.constant 0 : i32
    return %c0_i32, %c0_i32_0 : i32, i32
  }
  func.func @transform_1(%arg0: i32) -> (i32, i32) {
    %c0_i32 = arith.constant 0 : i32
    %c0_i32_0 = arith.constant 0 : i32
    %c0_i32_1 = arith.constant 0 : i32
    return %c0_i32, %c0_i32_0 : i32, i32
  }
  func.func @transform_2(%arg0: i32) -> (i32, i32) {
    %c0_i32 = arith.constant 0 : i32
    %c0_i32_0 = arith.constant 0 : i32
    %c0_i32_1 = arith.constant 0 : i32
    return %c0_i32, %c0_i32_0 : i32, i32
  }
  func.func @transform_3(%arg0: i32) -> (i32, i32) {
    %c0_i32 = arith.constant 0 : i32
    %c0_i32_0 = arith.constant 0 : i32
    %c0_i32_1 = arith.constant 0 : i32
    return %c0_i32, %c0_i32_0 : i32, i32
  }
  func.func @transform_4(%arg0: i32) -> (i32, i32) {
    %c0_i32 = arith.constant 0 : i32
    %c0_i32_0 = arith.constant 0 : i32
    %c0_i32_1 = arith.constant 0 : i32
    return %c0_i32, %c0_i32_0 : i32, i32
  }
}

</mosaic_0001>

<llo_original>
// kernel: tpu_custom_call.1
$region0: #{tpu_custom_call.1}
  #allocation0 [shape = 'u32[]', space=smem, size = 0x4, offset = 0x4, fixed_abs, tag = 'smem constant byte address 0x4 - core index']
  #allocation1 [shape = 'u32[72,128]{1,0:T(1,128)}', space=vmem, size = 0x9000, scoped, tag = 'internal scratch']
  %s0 = inlined_call_operand.hbm [shape: f32[16,128], index: 0, kind: input, shape index: {}]
  %s1 = inlined_call_operand.hbm [shape: bf16[128,896], index: 1, kind: input, shape index: {}]
  %s2 = inlined_call_operand.hbm [shape: f32[8,128], index: 2, kind: input, shape index: {}]
  %s3 = inlined_call_operand.hbm [shape: f32[16,16], index: 3, kind: input, shape index: {}]
  %s4 = inlined_call_operand.hbm [shape: f32[16,128], index: 4, kind: output, shape index: {}]
  %s5 = sld [smem:[#allocation0]]
  $region42: #{tpu_custom_call.1} parent=0
    _
  %s7 = ssub.s32 1, %s5
  %s8 = scalar_select 0, %s7, %s5
  $region1: #{tpu_custom_call.1} parent=0
    #allocation2 [shape = 'u8[8192]{0}', space=vmem, size = 0x2000, scoped, tag = 'input window, operand 0, single buffered']
    #allocation3 [shape = 's32[1]{0}', space=sflag, size = 0x4, scoped, tag = 'scoped memory for tpu_custom_call.1']
    #allocation4 [shape = 's32[1]{0}', space=sflag, size = 0x4, scoped, tag = 'scoped memory for tpu_custom_call.1']
    #allocation5 [shape = 'u8[229376]{0}', space=vmem, size = 0x38000, scoped, tag = 'input window, operand 1, single buffered']
    #allocation6 [shape = 's32[1]{0}', space=sflag, size = 0x4, scoped, tag = 'scoped memory for tpu_custom_call.1']
    #allocation7 [shape = 'u8[4096]{0}', space=vmem, size = 0x1000, scoped, tag = 'input window, operand 2, single buffered']
    #allocation8 [shape = 'u8[8192]{0}', space=vmem, size = 0x2000, scoped, tag = 'input window, operand 3, single buffered']
    #allocation9 [shape = 's32[1]{0}', space=sflag, size = 0x4, scoped, tag = 'scoped memory for tpu_custom_call.1']
    #allocation10 [shape = 'u8[8192]{0}', space=vmem, size = 0x2000, scoped, tag = 'output window, operand 0, single buffered']
    %9 = vsyncpa [#allocation3], 0
    %10 = vsyncpa [#allocation6], 0
    %11 = vsyncpa [#allocation9], 0
    %12 = vsyncpa [#allocation4], 0
    // Predicated region
    $region2: #{tpu_custom_call.1} parent=1 // pred_check
      _
    $region3: #{tpu_custom_call.1} parent=1 // pred_check_branch
      %14 = sbr.rel (0) target = $region5
    $region4: #{tpu_custom_call.1} parent=1 // pred_region
      %16 = vsyncadd [#allocation3], 0
      %s17 = sshll.u32 %s0, 4
      %s18 = int_to_ptr.hbm [resolvable:$true] %s17
      %s19 = sshll.u32 [#allocation2], 4
      %s20 = int_to_ptr.vmem [resolvable:$true] %s19
      %25 = dma.hbm_to_vmem [thread:$0]  %s18, 256, %s20, [#allocation3], 128, 128, 8
    $region5: #{tpu_custom_call.1} parent=1 // pred_fallthru
      _
    // Predicated region
    $region6: #{tpu_custom_call.1} parent=1 // pred_check
      _
    $region7: #{tpu_custom_call.1} parent=1 // pred_check_branch
      %27 = sbr.rel (0) target = $region9
    $region8: #{tpu_custom_call.1} parent=1 // pred_region
      %29 = vsyncadd [#allocation6], 0
      %s30 = sshll.u32 %s1, 4
      %s31 = int_to_ptr.hbm [resolvable:$true] %s30
      %s32 = sshll.u32 [#allocation5], 4
      %s33 = int_to_ptr.vmem [resolvable:$true] %s32
      %38 = dma.hbm_to_vmem [thread:$0]  %s31, 7168, %s33, [#allocation6], 448, 448, 28
    $region9: #{tpu_custom_call.1} parent=1 // pred_fallthru
      _
    // Predicated region
    $region10: #{tpu_custom_call.1} parent=1 // pred_check
      _
    $region11: #{tpu_custom_call.1} parent=1 // pred_check_branch
      %40 = sbr.rel (0) target = $region13
    $region12: #{tpu_custom_call.1} parent=1 // pred_region
      %42 = vsyncadd [#allocation6], 0
      %s44 = sshll.u32 %s2, 4
      %s45 = int_to_ptr.hbm [resolvable:$true] %s44
      %s46 = sshll.u32 [#allocation7], 4
      %s47 = int_to_ptr.vmem [resolvable:$true] %s46
      %49 = dma.hbm_to_vmem [thread:$0]  %s45, 128, %s47, [#allocation6]
    $region13: #{tpu_custom_call.1} parent=1 // pred_fallthru
      _
    // Predicated region
    $region14: #{tpu_custom_call.1} parent=1 // pred_check
      _
    $region15: #{tpu_custom_call.1} parent=1 // pred_check_branch
      %51 = sbr.rel (0) target = $region17
    $region16: #{tpu_custom_call.1} parent=1 // pred_region
      %53 = vsyncadd [#allocation9], 0
      %s54 = sshll.u32 %s3, 4
      %s55 = int_to_ptr.hbm [resolvable:$true] %s54
      %s56 = sshll.u32 [#allocation8], 4
      %s57 = int_to_ptr.vmem [resolvable:$true] %s56
      %62 = dma.hbm_to_vmem [thread:$0]  %s55, 256, %s57, [#allocation9], 128, 128, 8
    $region17: #{tpu_custom_call.1} parent=1 // pred_fallthru
      _
    // Predicated region
    $region18: #{tpu_custom_call.1} parent=1 // pred_check
      _
    $region19: #{tpu_custom_call.1} parent=1 // pred_check_branch
      %64 = sbr.rel (0) target = $region21
    $region20: #{tpu_custom_call.1} parent=1 // pred_region
      %66 = dma.done [#allocation3], 256
    $region21: #{tpu_custom_call.1} parent=1 // pred_fallthru
      _
    // Predicated region
    $region22: #{tpu_custom_call.1} parent=1 // pred_check
      _
    $region23: #{tpu_custom_call.1} parent=1 // pred_check_branch
      %68 = sbr.rel (0) target = $region25
    $region24: #{tpu_custom_call.1} parent=1 // pred_region
      %70 = dma.done [#allocation6], 7168
    $region25: #{tpu_custom_call.1} parent=1 // pred_fallthru
      _
    // Predicated region
    $region26: #{tpu_custom_call.1} parent=1 // pred_check
      _
    $region27: #{tpu_custom_call.1} parent=1 // pred_check_branch
      %72 = sbr.rel (0) target = $region29
    $region28: #{tpu_custom_call.1} parent=1 // pred_region
      %74 = dma.done [#allocation6], 128
    $region29: #{tpu_custom_call.1} parent=1 // pred_fallthru
      _
    // Predicated region
    $region30: #{tpu_custom_call.1} parent=1 // pred_check
      _
    $region31: #{tpu_custom_call.1} parent=1 // pred_check_branch
      %76 = sbr.rel (0) target = $region33
    $region32: #{tpu_custom_call.1} parent=1 // pred_region
      %78 = dma.done [#allocation9], 256
    $region33: #{tpu_custom_call.1} parent=1 // pred_fallthru
      _
    %v80 = vld [vmem:[#allocation2] sm:$0xff]
    %v81 = vld [vmem:[#allocation2 + $0x8] sm:$0xff]
    %v82 = vpack.c.bf16 %v80, %v80
    %v83 = vpack.c.bf16 %v81, %v81
    %v84 = vunpack.c.l.bf16 %v82
    %v85 = vunpack.c.l.bf16 %v83
    %v86 = vsub.f32 %v80, %v84
    %v87 = vsub.f32 %v81, %v85
    %v88 = vpack.c.bf16 %v87, %v86
    %v89 = vld [vmem:[#allocation7] sm:$0xff]
    %v90 = vld [vmem:[#allocation8] sm:$0xff]
    %v91 = vld [vmem:[#allocation8 + $0x8] sm:$0xff]
    %v92 = vld [vmem:[#allocation5] sm:$0xff]
    %v93 = vld [vmem:[#allocation5 + $0x8] sm:$0xff]
    %v94 = vld [vmem:[#allocation5 + $0x10] sm:$0xff]
    %v95 = vld [vmem:[#allocation5 + $0x1c] sm:$0xff]
    %v96 = vld [vmem:[#allocation5 + $0x24] sm:$0xff]
    %v97 = vld [vmem:[#allocation5 + $0x2c] sm:$0xff]
    %v98 = vld [vmem:[#allocation5 + $0x38] sm:$0xff]
    %v99 = vld [vmem:[#allocation5 + $0x40] sm:$0xff]
    %v100 = vld [vmem:[#allocation5 + $0x48] sm:$0xff]
    %v101 = vld [vmem:[#allocation5 + $0x54] sm:$0xff]
    %v102 = vld [vmem:[#allocation5 + $0x5c] sm:$0xff]
    %v103 = vld [vmem:[#allocation5 + $0x64] sm:$0xff]
    %v104 = vld [vmem:[#allocation5 + $0x70] sm:$0xff]
    %v105 = vld [vmem:[#allocation5 + $0x78] sm:$0xff]
    %v106 = vld [vmem:[#allocation5 + $0x80] sm:$0xff]
    %v107 = vld [vmem:[#allocation5 + $0x8c] sm:$0xff]
    %v108 = vld [vmem:[#allocation5 + $0x94] sm:$0xff]
    %v109 = vld [vmem:[#allocation5 + $0x9c] sm:$0xff]
    %v110 = vld [vmem:[#allocation5 + $0xa8] sm:$0xff]
    %v111 = vld [vmem:[#allocation5 + $0xb0] sm:$0xff]
    %v112 = vld [vmem:[#allocation5 + $0xb8] sm:$0xff]
    %v113 = vld [vmem:[#allocation5 + $0xc4] sm:$0xff]
    %v114 = vld [vmem:[#allocation5 + $0xcc] sm:$0xff]
    %v115 = vld [vmem:[#allocation5 + $0xd4] sm:$0xff]
    %v116 = vld [vmem:[#allocation5 + $0xe0] sm:$0xff]
    %v117 = vld [vmem:[#allocation5 + $0xe8] sm:$0xff]
    %v118 = vld [vmem:[#allocation5 + $0xf0] sm:$0xff]
    %v119 = vld [vmem:[#allocation5 + $0xfc] sm:$0xff]
    %v120 = vld [vmem:[#allocation5 + $0x104] sm:$0xff]
    %v121 = vld [vmem:[#allocation5 + $0x10c] sm:$0xff]
    %v122 = vld [vmem:[#allocation5 + $0x118] sm:$0xff]
    %v123 = vld [vmem:[#allocation5 + $0x120] sm:$0xff]
    %v124 = vld [vmem:[#allocation5 + $0x128] sm:$0xff]
    %v125 = vld [vmem:[#allocation5 + $0x134] sm:$0xff]
    %v126 = vld [vmem:[#allocation5 + $0x13c] sm:$0xff]
    %v127 = vld [vmem:[#allocation5 + $0x144] sm:$0xff]
    %v128 = vld [vmem:[#allocation5 + $0x150] sm:$0xff]
    %v129 = vld [vmem:[#allocation5 + $0x158] sm:$0xff]
    %v130 = vld [vmem:[#allocation5 + $0x160] sm:$0xff]
    %v131 = vld [vmem:[#allocation5 + $0x16c] sm:$0xff]
    %v132 = vld [vmem:[#allocation5 + $0x174] sm:$0xff]
    %v133 = vld [vmem:[#allocation5 + $0x17c] sm:$0xff]
    %v134 = vld [vmem:[#allocation5 + $0x188] sm:$0xff]
    %v135 = vld [vmem:[#allocation5 + $0x190] sm:$0xff]
    %v136 = vld [vmem:[#allocation5 + $0x198] sm:$0xff]
    %v137 = vld [vmem:[#allocation5 + $0x1a4] sm:$0xff]
    %v138 = vld [vmem:[#allocation5 + $0x1ac] sm:$0xff]
    %v139 = vld [vmem:[#allocation5 + $0x1b4] sm:$0xff]
    %v142 = vunpack.c.l.b16 %v82
    %v143 = vunpack.c.l.b16 %v83
    %v144 = vpack.c.b16 %v143, %v142
    %v194 = vunpack.c.l.b16 %v92
    %v195 = vunpack.c.h.b16 %v92
    %v196 = vunpack.c.l.b16 %v93
    %v197 = vunpack.c.h.b16 %v93
    %v198 = vunpack.c.l.b16 %v94
    %v199 = vunpack.c.h.b16 %v94
    %v200 = vunpack.c.l.b16 %v95
    %v201 = vunpack.c.h.b16 %v95
    %v202 = vunpack.c.l.b16 %v96
    %v203 = vunpack.c.h.b16 %v96
    %v204 = vunpack.c.l.b16 %v97
    %v205 = vunpack.c.h.b16 %v97
    %v206 = vunpack.c.l.b16 %v98
    %v207 = vunpack.c.h.b16 %v98
    %v208 = vunpack.c.l.b16 %v99
    %v209 = vunpack.c.h.b16 %v99
    %v210 = vunpack.c.l.b16 %v100
    %v211 = vunpack.c.h.b16 %v100
    %v212 = vunpack.c.l.b16 %v101
    %v213 = vunpack.c.h.b16 %v101
    %v214 = vunpack.c.l.b16 %v102
    %v215 = vunpack.c.h.b16 %v102
    %v216 = vunpack.c.l.b16 %v103
    %v217 = vunpack.c.h.b16 %v103
    %v218 = vunpack.c.l.b16 %v104
    %v219 = vunpack.c.h.b16 %v104
    %v220 = vunpack.c.l.b16 %v105
    %v221 = vunpack.c.h.b16 %v105
    %v222 = vunpack.c.l.b16 %v106
    %v223 = vunpack.c.h.b16 %v106
    %v224 = vunpack.c.l.b16 %v107
    %v225 = vunpack.c.h.b16 %v107
    %v226 = vunpack.c.l.b16 %v108
    %v227 = vunpack.c.h.b16 %v108
    %v228 = vunpack.c.l.b16 %v109
    %v229 = vunpack.c.h.b16 %v109
    %v230 = vunpack.c.l.b16 %v110
    %v231 = vunpack.c.h.b16 %v110
    %v232 = vunpack.c.l.b16 %v111
    %v233 = vunpack.c.h.b16 %v111
    %v234 = vunpack.c.l.b16 %v112
    %v235 = vunpack.c.h.b16 %v112
    %v236 = vunpack.c.l.b16 %v113
    %v237 = vunpack.c.h.b16 %v113
    %v238 = vunpack.c.l.b16 %v114
    %v239 = vunpack.c.h.b16 %v114
    %v240 = vunpack.c.l.b16 %v115
    %v241 = vunpack.c.h.b16 %v115
    %v242 = vunpack.c.l.b16 %v116
    %v243 = vunpack.c.h.b16 %v116
    %v244 = vunpack.c.l.b16 %v117
    %v245 = vunpack.c.h.b16 %v117
    %v246 = vunpack.c.l.b16 %v118
    %v247 = vunpack.c.h.b16 %v118
    %v248 = vunpack.c.l.b16 %v119
    %v249 = vunpack.c.h.b16 %v119
    %v250 = vunpack.c.l.b16 %v120
    %v251 = vunpack.c.h.b16 %v120
    %v252 = vunpack.c.l.b16 %v121
    %v253 = vunpack.c.h.b16 %v121
    %v254 = vunpack.c.l.b16 %v122
    %v255 = vunpack.c.h.b16 %v122
    %v256 = vunpack.c.l.b16 %v123
    %v257 = vunpack.c.h.b16 %v123
    %v258 = vunpack.c.l.b16 %v124
    %v259 = vunpack.c.h.b16 %v124
    %v260 = vunpack.c.l.b16 %v125
    %v261 = vunpack.c.h.b16 %v125
    %v262 = vunpack.c.l.b16 %v126
    %v263 = vunpack.c.h.b16 %v126
    %v264 = vunpack.c.l.b16 %v127
    %v265 = vunpack.c.h.b16 %v127
    %v266 = vunpack.c.l.b16 %v128
    %v267 = vunpack.c.h.b16 %v128
    %v268 = vunpack.c.l.b16 %v129
    %v269 = vunpack.c.h.b16 %v129
    %v270 = vunpack.c.l.b16 %v130
    %v271 = vunpack.c.h.b16 %v130
    %v272 = vunpack.c.l.b16 %v131
    %v273 = vunpack.c.h.b16 %v131
    %v274 = vunpack.c.l.b16 %v132
    %v275 = vunpack.c.h.b16 %v132
    %v276 = vunpack.c.l.b16 %v133
    %v277 = vunpack.c.h.b16 %v133
    %v278 = vunpack.c.l.b16 %v134
    %v279 = vunpack.c.h.b16 %v134
    %v280 = vunpack.c.l.b16 %v135
    %v281 = vunpack.c.h.b16 %v135
    %v282 = vunpack.c.l.b16 %v136
    %v283 = vunpack.c.h.b16 %v136
    %v284 = vunpack.c.l.b16 %v137
    %v285 = vunpack.c.h.b16 %v137
    %v286 = vunpack.c.l.b16 %v138
    %v287 = vunpack.c.h.b16 %v138
    %v288 = vunpack.c.l.b16 %v139
    %v289 = vunpack.c.h.b16 %v139
    %v290 = vpack.c.b16 %v200, %v194
    %v291 = vpack.c.b16 %v201, %v195
    %v292 = vpack.c.b16 %v202, %v196
    %v293 = vpack.c.b16 %v203, %v197
    %v294 = vpack.c.b16 %v204, %v198
    %v295 = vpack.c.b16 %v205, %v199
    %v296 = vpack.c.b16 %v212, %v206
    %v297 = vpack.c.b16 %v213, %v207
    %v298 = vpack.c.b16 %v214, %v208
    %v299 = vpack.c.b16 %v215, %v209
    %v300 = vpack.c.b16 %v216, %v210
    %v301 = vpack.c.b16 %v217, %v211
    %v302 = vpack.c.b16 %v224, %v218
    %v303 = vpack.c.b16 %v225, %v219
    %v304 = vpack.c.b16 %v226, %v220
    %v305 = vpack.c.b16 %v227, %v221
    %v306 = vpack.c.b16 %v228, %v222
    %v307 = vpack.c.b16 %v229, %v223
    %v308 = vpack.c.b16 %v236, %v230
    %v309 = vpack.c.b16 %v237, %v231
    %v310 = vpack.c.b16 %v238, %v232
    %v311 = vpack.c.b16 %v239, %v233
    %v312 = vpack.c.b16 %v240, %v234
    %v313 = vpack.c.b16 %v241, %v235
    %v314 = vpack.c.b16 %v248, %v242
    %v315 = vpack.c.b16 %v249, %v243
    %v316 = vpack.c.b16 %v250, %v244
    %v317 = vpack.c.b16 %v251, %v245
    %v318 = vpack.c.b16 %v252, %v246
    %v319 = vpack.c.b16 %v253, %v247
    %v320 = vpack.c.b16 %v260, %v254
    %v321 = vpack.c.b16 %v261, %v255
    %v322 = vpack.c.b16 %v262, %v256
    %v323 = vpack.c.b16 %v263, %v257
    %v324 = vpack.c.b16 %v264, %v258
    %v325 = vpack.c.b16 %v265, %v259
    %v326 = vpack.c.b16 %v272, %v266
    %v327 = vpack.c.b16 %v273, %v267
    %v328 = vpack.c.b16 %v274, %v268
    %v329 = vpack.c.b16 %v275, %v269
    %v330 = vpack.c.b16 %v276, %v270
    %v331 = vpack.c.b16 %v277, %v271
    %v332 = vpack.c.b16 %v284, %v278
    %v333 = vpack.c.b16 %v285, %v279
    %v334 = vpack.c.b16 %v286, %v280
    %v335 = vpack.c.b16 %v287, %v281
    %v336 = vpack.c.b16 %v288, %v282
    %v337 = vpack.c.b16 %v289, %v283
    %386 = vmatpush.bf16.msra.mxu0 %v332
    %387 = vmatpush.bf16.msra.mxu0 %v326
    %388 = vmatpush.bf16.msra.mxu0 %v320
    %389 = vmatpush.bf16.msra.mxu0 %v314
    %390 = vmatpush.bf16.msra.mxu0 %v308
    %391 = vmatpush.bf16.msra.mxu0 %v302
    %392 = vmatpush.bf16.msra.mxu0 %v296
    %393 = vmatpush.bf16.msra.mxu0 %v290
    %394 = vmatmul.bf16.gmra.mxu0 %v144
    %v395 = vpop.f32.mrf.mxu0
    %v396 = vadd.f32 0.0, %v395
    %v397 = vpop.f32.mrf.mxu0
    %v398 = vadd.f32 0.0, %v397
    %399 = vdwg.mxu0
    %400 = vmatpush.bf16.msra.mxu0 %v333
    %401 = vmatpush.bf16.msra.mxu0 %v327
    %402 = vmatpush.bf16.msra.mxu0 %v321
    %403 = vmatpush.bf16.msra.mxu0 %v315
    %404 = vmatpush.bf16.msra.mxu0 %v309
    %405 = vmatpush.bf16.msra.mxu0 %v303
    %406 = vmatpush.bf16.msra.mxu0 %v297
    %407 = vmatpush.bf16.msra.mxu0 %v291
    %408 = vmatmul.bf16.gmra.mxu0 %v144
    %v409 = vpop.f32.mrf.mxu0
    %v410 = vadd.f32 0.0, %v409
    %v411 = vpop.f32.mrf.mxu0
    %v412 = vadd.f32 0.0, %v411
    %413 = vdwg.mxu0
    %414 = vmatpush.bf16.msra.mxu0 %v334
    %415 = vmatpush.bf16.msra.mxu0 %v328
    %416 = vmatpush.bf16.msra.mxu0 %v322
    %417 = vmatpush.bf16.msra.mxu0 %v316
    %418 = vmatpush.bf16.msra.mxu0 %v310
    %419 = vmatpush.bf16.msra.mxu0 %v304
    %420 = vmatpush.bf16.msra.mxu0 %v298
    %421 = vmatpush.bf16.msra.mxu0 %v292
    %422 = vmatmul.bf16.gmra.mxu0 %v144
    %v423 = vpop.f32.mrf.mxu0
    %v424 = vadd.f32 0.0, %v423
    %v425 = vpop.f32.mrf.mxu0
    %v426 = vadd.f32 0.0, %v425
    %427 = vdwg.mxu0
    %428 = vmatpush.bf16.msra.mxu0 %v335
    %429 = vmatpush.bf16.msra.mxu0 %v329
    %430 = vmatpush.bf16.msra.mxu0 %v323
    %431 = vmatpush.bf16.msra.mxu0 %v317
    %432 = vmatpush.bf16.msra.mxu0 %v311
    %433 = vmatpush.bf16.msra.mxu0 %v305
    %434 = vmatpush.bf16.msra.mxu0 %v299
    %435 = vmatpush.bf16.msra.mxu0 %v293
    %436 = vmatmul.bf16.gmra.mxu0 %v144
    %v437 = vpop.f32.mrf.mxu0
    %v438 = vadd.f32 0.0, %v437
    %v439 = vpop.f32.mrf.mxu0
    %v440 = vadd.f32 0.0, %v439
    %441 = vdwg.mxu0
    %442 = vmatpush.bf16.msra.mxu0 %v336
    %443 = vmatpush.bf16.msra.mxu0 %v330
    %444 = vmatpush.bf16.msra.mxu0 %v324
    %445 = vmatpush.bf16.msra.mxu0 %v318
    %446 = vmatpush.bf16.msra.mxu0 %v312
    %447 = vmatpush.bf16.msra.mxu0 %v306
    %448 = vmatpush.bf16.msra.mxu0 %v300
    %449 = vmatpush.bf16.msra.mxu0 %v294
    %450 = vmatmul.bf16.gmra.mxu0 %v144
    %v451 = vpop.f32.mrf.mxu0
    %v452 = vadd.f32 0.0, %v451
    %v453 = vpop.f32.mrf.mxu0
    %v454 = vadd.f32 0.0, %v453
    %455 = vdwg.mxu0
    %456 = vmatpush.bf16.msra.mxu0 %v337
    %457 = vmatpush.bf16.msra.mxu0 %v331
    %458 = vmatpush.bf16.msra.mxu0 %v325
    %459 = vmatpush.bf16.msra.mxu0 %v319
    %460 = vmatpush.bf16.msra.mxu0 %v313
    %461 = vmatpush.bf16.msra.mxu0 %v307
    %462 = vmatpush.bf16.msra.mxu0 %v301
    %463 = vmatpush.bf16.msra.mxu0 %v295
    %464 = vmatmul.bf16.gmra.mxu0 %v144
    %v465 = vpop.f32.mrf.mxu0
    %v466 = vadd.f32 0.0, %v465
    %v467 = vpop.f32.mrf.mxu0
    %v468 = vadd.f32 0.0, %v467
    %469 = vdwg.mxu0
    %v470 = vperm.slane %v89, 0
    %v471 = vadd.f32 %v396, %v470
    %v472 = vadd.f32 %v398, %v470
    %v473 = vadd.f32 %v410, %v424
    %v474 = vadd.f32 %v412, %v426
    %v475 = vld [vmem:[#allocation5 + $0x4] sm:$0xf]
    %v476 = vld [vmem:[#allocation5 + $0x20] sm:$0xf]
    %v477 = vld [vmem:[#allocation5 + $0x3c] sm:$0xf]
    %v478 = vld [vmem:[#allocation5 + $0x58] sm:$0xf]
    %v479 = vld [vmem:[#allocation5 + $0x74] sm:$0xf]
    %v480 = vld [vmem:[#allocation5 + $0x90] sm:$0xf]
    %v481 = vld [vmem:[#allocation5 + $0xac] sm:$0xf]
    %v482 = vld [vmem:[#allocation5 + $0xc8] sm:$0xf]
    %v483 = vld [vmem:[#allocation5 + $0xe4] sm:$0xf]
    %v484 = vld [vmem:[#allocation5 + $0x100] sm:$0xf]
    %v485 = vld [vmem:[#allocation5 + $0x11c] sm:$0xf]
    %v486 = vld [vmem:[#allocation5 + $0x138] sm:$0xf]
    %v487 = vld [vmem:[#allocation5 + $0x154] sm:$0xf]
    %v488 = vld [vmem:[#allocation5 + $0x170] sm:$0xf]
    %v489 = vld [vmem:[#allocation5 + $0x18c] sm:$0xf]
    %v490 = vld [vmem:[#allocation5 + $0x1a8] sm:$0xf]
    %v507 = vunpack.c.l.b16 %v475
    %v508 = vunpack.c.l.b16 %v476
    %v509 = vunpack.c.l.b16 %v477
    %v510 = vunpack.c.l.b16 %v478
    %v511 = vunpack.c.l.b16 %v479
    %v512 = vunpack.c.l.b16 %v480
    %v513 = vunpack.c.l.b16 %v481
    %v514 = vunpack.c.l.b16 %v482
    %v515 = vunpack.c.l.b16 %v483
    %v516 = vunpack.c.l.b16 %v484
    %v517 = vunpack.c.l.b16 %v485
    %v518 = vunpack.c.l.b16 %v486
    %v519 = vunpack.c.l.b16 %v487
    %v520 = vunpack.c.l.b16 %v488
    %v521 = vunpack.c.l.b16 %v489
    %v522 = vunpack.c.l.b16 %v490
    %v523 = vpack.c.b16 %v508, %v507
    %v524 = vpack.c.b16 %v510, %v509
    %v525 = vpack.c.b16 %v512, %v511
    %v526 = vpack.c.b16 %v514, %v513
    %v527 = vpack.c.b16 %v516, %v515
    %v528 = vpack.c.b16 %v518, %v517
    %v529 = vpack.c.b16 %v520, %v519
    %v530 = vpack.c.b16 %v522, %v521
    %539 = vmatpush.bf16.msra.mxu0 %v530
    %540 = vmatpush.bf16.msra.mxu0 %v529
    %541 = vmatpush.bf16.msra.mxu0 %v528
    %542 = vmatpush.bf16.msra.mxu0 %v527
    %543 = vmatpush.bf16.msra.mxu0 %v526
    %544 = vmatpush.bf16.msra.mxu0 %v525
    %545 = vmatpush.bf16.msra.mxu0 %v524
    %546 = vmatpush.bf16.msra.mxu0 %v523
    %547 = vmatmul.bf16.gmra.mxu0 %v88
    %v548 = vpop.f32.mrf.mxu0
    %v549 = vadd.f32 0.0, %v548
    %v550 = vpop.f32.mrf.mxu0
    %v551 = vadd.f32 0.0, %v550
    %552 = vdwg.mxu0
    %v553 = vadd.f32 %v473, %v549
    %v554 = vadd.f32 %v474, %v551
    %v555 = vperm.slane %v89, 1
    %v556 = vadd.f32 %v553, %v555
    %v557 = vadd.f32 %v554, %v555
    %vm558 = vcmp.lt.f32.partialorder %v556, 0.1
    %vm559 = vcmp.lt.f32.partialorder %v557, 0.1
    %v560 = vsel %vm558, 1, 0
    %v561 = vsel %vm559, 1, 0
    %v562 = vcvt.s32.f32 %v560
    %v563 = vcvt.s32.f32 %v561
    %v564 = vpack.c.bf16 %v440, %v438
    %v565 = vpack.c.bf16 %v454, %v452
    %566 = vmatpush.bf16.xpose.msra.mxu0 0
    %567 = vmatpush.bf16.xpose.msra.mxu0 0
    %568 = vmatpush.bf16.xpose.msra.mxu0 0
    %569 = vmatpush.bf16.xpose.msra.mxu0 0
    %570 = vmatpush.bf16.xpose.msra.mxu0 0
    %571 = vmatpush.bf16.xpose.msra.mxu0 0
    %572 = vmatpush.bf16.xpose.msra.mxu0 0
    %573 = vmatpush.bf16.xpose.msra.mxu0 %v565
    %574 = vmatmul.bf16.gmra.mxu0 %v564
    %v575 = vpop.f32.mrf.mxu0
    %v576 = vadd.f32 %v90, %v575
    %v577 = vpop.f32.mrf.mxu0
    %v578 = vadd.f32 %v91, %v577
    %579 = vdwg.mxu0
    %vm580 = vcmask 130048
    %v581 = vsel %vm580, %v576, -inf
    %582 = vmax.xlane.f32.xlu0 %v581
    %v583 = vpop.xlane.xlu0 %582
    %v584 = vsel %vm580, %v578, -inf
    %585 = vmax.xlane.f32.xlu0 %v584
    %v586 = vpop.xlane.xlu0 %585
    %v587 = vsub.f32 %v576, %v583
    %v588 = vsub.f32 %v578, %v586
    %v589 = vmul.f32 %v587, 1.442695
    %v590 = vpow.pop %v589
    %v591 = vmul.f32 %v588, 1.442695
    %v592 = vpow.pop %v591
    %v593 = vsel %vm580, %v590, 0.0
    %594 = vadd.xlane.f32.xlu0 %v593
    %v595 = vpop.xlane.xlu0 %594
    %v596 = vsel %vm580, %v592, 0.0
    %597 = vadd.xlane.f32.xlu0 %v596
    %v598 = vpop.xlane.xlu0 %597
    %v599 = vrcp.pop %v595
    %v600 = vrcp.pop %v598
    %v601 = vmul.f32 %v590, %v599
    %v602 = vmul.f32 %v592, %v600
    %v603 = vpack.c.bf16 %v602, %v601
    %v604 = vpack.c.bf16 %v468, %v466
    %v606 = vsel %vm580, %v603, 0
    %608 = vmatpush.bf16.msra.mxu0 0
    %609 = vmatpush.bf16.msra.mxu0 0
    %610 = vmatpush.bf16.msra.mxu0 0
    %611 = vmatpush.bf16.msra.mxu0 0
    %612 = vmatpush.bf16.msra.mxu0 0
    %613 = vmatpush.bf16.msra.mxu0 0
    %614 = vmatpush.bf16.msra.mxu0 0
    %615 = vmatpush.bf16.msra.mxu0 %v604
    %616 = vmatmul.bf16.gmra.mxu0 %v606
    %v617 = vpop.f32.mrf.mxu0
    %v618 = vadd.f32 0.0, %v617
    %v619 = vpop.f32.mrf.mxu0
    %v620 = vadd.f32 0.0, %v619
    %621 = vdwg.mxu0
    %v622 = vmul.f32 %v562, %v618
    %v623 = vmul.f32 %v563, %v620
    %v624 = vpack.c.bf16 %v472, %v471
    %v625 = vld [vmem:[#allocation5 + $0xc] sm:$0xf]
    %v626 = vld [vmem:[#allocation5 + $0x28] sm:$0xf]
    %v627 = vld [vmem:[#allocation5 + $0x44] sm:$0xf]
    %v628 = vld [vmem:[#allocation5 + $0x60] sm:$0xf]
    %v629 = vld [vmem:[#allocation5 + $0x7c] sm:$0xf]
    %v630 = vld [vmem:[#allocation5 + $0x98] sm:$0xf]
    %v631 = vld [vmem:[#allocation5 + $0xb4] sm:$0xf]
    %v632 = vld [vmem:[#allocation5 + $0xd0] sm:$0xf]
    %v633 = vld [vmem:[#allocation5 + $0xec] sm:$0xf]
    %v634 = vld [vmem:[#allocation5 + $0x108] sm:$0xf]
    %v635 = vld [vmem:[#allocation5 + $0x124] sm:$0xf]
    %v636 = vld [vmem:[#allocation5 + $0x140] sm:$0xf]
    %v637 = vld [vmem:[#allocation5 + $0x15c] sm:$0xf]
    %v638 = vld [vmem:[#allocation5 + $0x178] sm:$0xf]
    %v639 = vld [vmem:[#allocation5 + $0x194] sm:$0xf]
    %v640 = vld [vmem:[#allocation5 + $0x1b0] sm:$0xf]
    %v657 = vunpack.c.l.b16 %v625
    %v658 = vunpack.c.l.b16 %v626
    %v659 = vunpack.c.l.b16 %v627
    %v660 = vunpack.c.l.b16 %v628
    %v661 = vunpack.c.l.b16 %v629
    %v662 = vunpack.c.l.b16 %v630
    %v663 = vunpack.c.l.b16 %v631
    %v664 = vunpack.c.l.b16 %v632
    %v665 = vunpack.c.l.b16 %v633
    %v666 = vunpack.c.l.b16 %v634
    %v667 = vunpack.c.l.b16 %v635
    %v668 = vunpack.c.l.b16 %v636
    %v669 = vunpack.c.l.b16 %v637
    %v670 = vunpack.c.l.b16 %v638
    %v671 = vunpack.c.l.b16 %v639
    %v672 = vunpack.c.l.b16 %v640
    %v673 = vpack.c.b16 %v658, %v657
    %v674 = vpack.c.b16 %v660, %v659
    %v675 = vpack.c.b16 %v662, %v661
    %v676 = vpack.c.b16 %v664, %v663
    %v677 = vpack.c.b16 %v666, %v665
    %v678 = vpack.c.b16 %v668, %v667
    %v679 = vpack.c.b16 %v670, %v669
    %v680 = vpack.c.b16 %v672, %v671
    %689 = vmatpush.bf16.msra.mxu0 %v680
    %690 = vmatpush.bf16.msra.mxu0 %v679
    %691 = vmatpush.bf16.msra.mxu0 %v678
    %692 = vmatpush.bf16.msra.mxu0 %v677
    %693 = vmatpush.bf16.msra.mxu0 %v676
    %694 = vmatpush.bf16.msra.mxu0 %v675
    %695 = vmatpush.bf16.msra.mxu0 %v674
    %696 = vmatpush.bf16.msra.mxu0 %v673
    %697 = vmatmul.bf16.gmra.mxu0 %v624
    %v698 = vpop.f32.mrf.mxu0
    %v699 = vadd.f32 0.0, %v698
    %v700 = vpop.f32.mrf.mxu0
    %v701 = vadd.f32 0.0, %v700
    %702 = vdwg.mxu0
    %v703 = vpack.c.bf16 %v623, %v622
    %704 = vmatpush.bf16.msra.mxu0 %v336
    %705 = vmatpush.bf16.msra.mxu0 %v330
    %706 = vmatpush.bf16.msra.mxu0 %v324
    %707 = vmatpush.bf16.msra.mxu0 %v318
    %708 = vmatpush.bf16.msra.mxu0 %v312
    %709 = vmatpush.bf16.msra.mxu0 %v306
    %710 = vmatpush.bf16.msra.mxu0 %v300
    %711 = vmatpush.bf16.msra.mxu0 %v294
    %712 = vmatmul.bf16.gmra.mxu0 %v703
    %v713 = vpop.f32.mrf.mxu0
    %v714 = vadd.f32 0.0, %v713
    %v715 = vpop.f32.mrf.mxu0
    %v716 = vadd.f32 0.0, %v715
    %717 = vdwg.mxu0
    %718 = vmatpush.bf16.msra.mxu0 %v337
    %719 = vmatpush.bf16.msra.mxu0 %v331
    %720 = vmatpush.bf16.msra.mxu0 %v325
    %721 = vmatpush.bf16.msra.mxu0 %v319
    %722 = vmatpush.bf16.msra.mxu0 %v313
    %723 = vmatpush.bf16.msra.mxu0 %v307
    %724 = vmatpush.bf16.msra.mxu0 %v301
    %725 = vmatpush.bf16.msra.mxu0 %v295
    %726 = vmatmul.bf16.gmra.mxu0 %v703
    %v727 = vpop.f32.mrf.mxu0
    %v728 = vadd.f32 0.0, %v727
    %v729 = vpop.f32.mrf.mxu0
    %v730 = vadd.f32 0.0, %v729
    %731 = vdwg.mxu0
    %v732 = vpack.c.bf16 %v701, %v699
    %v733 = vpack.c.bf16 %v716, %v714
    %734 = vmatpush.bf16.xpose.msra.mxu0 0
    %735 = vmatpush.bf16.xpose.msra.mxu0 0
    %736 = vmatpush.bf16.xpose.msra.mxu0 0
    %737 = vmatpush.bf16.xpose.msra.mxu0 0
    %738 = vmatpush.bf16.xpose.msra.mxu0 0
    %739 = vmatpush.bf16.xpose.msra.mxu0 0
    %740 = vmatpush.bf16.xpose.msra.mxu0 0
    %741 = vmatpush.bf16.xpose.msra.mxu0 %v733
    %742 = vmatmul.bf16.gmra.mxu0 %v732
    %v743 = vpop.f32.mrf.mxu0
    %v744 = vadd.f32 %v90, %v743
    %v745 = vpop.f32.mrf.mxu0
    %v746 = vadd.f32 %v91, %v745
    %747 = vdwg.mxu0
    %v748 = vsel %vm580, %v744, -inf
    %749 = vmax.xlane.f32.xlu0 %v748
    %v750 = vpop.xlane.xlu0 %749
    %v751 = vsel %vm580, %v746, -inf
    %752 = vmax.xlane.f32.xlu0 %v751
    %v753 = vpop.xlane.xlu0 %752
    %v754 = vsub.f32 %v744, %v750
    %v755 = vsub.f32 %v746, %v753
    %v756 = vmul.f32 %v754, 1.442695
    %v757 = vpow.pop %v756
    %v758 = vmul.f32 %v755, 1.442695
    %v759 = vpow.pop %v758
    %v760 = vsel %vm580, %v757, 0.0
    %761 = vadd.xlane.f32.xlu0 %v760
    %v762 = vpop.xlane.xlu0 %761
    %v763 = vsel %vm580, %v759, 0.0
    %764 = vadd.xlane.f32.xlu0 %v763
    %v765 = vpop.xlane.xlu0 %764
    %v766 = vrcp.pop %v762
    %v767 = vrcp.pop %v765
    %v768 = vmul.f32 %v757, %v766
    %v769 = vmul.f32 %v759, %v767
    %v770 = vpack.c.bf16 %v769, %v768
    %v771 = vpack.c.bf16 %v730, %v728
    %v773 = vsel %vm580, %v770, 0
    %775 = vmatpush.bf16.msra.mxu0 0
    %776 = vmatpush.bf16.msra.mxu0 0
    %777 = vmatpush.bf16.msra.mxu0 0
    %778 = vmatpush.bf16.msra.mxu0 0
    %779 = vmatpush.bf16.msra.mxu0 0
    %780 = vmatpush.bf16.msra.mxu0 0
    %781 = vmatpush.bf16.msra.mxu0 0
    %782 = vmatpush.bf16.msra.mxu0 %v771
    %783 = vmatmul.bf16.gmra.mxu0 %v773
    %v784 = vpop.f32.mrf.mxu0
    %v785 = vadd.f32 0.0, %v784
    %v786 = vpop.f32.mrf.mxu0
    %v787 = vadd.f32 0.0, %v786
    %788 = vdwg.mxu0
    %v789 = vpack.c.bf16 %v787, %v785
    %v790 = vld [vmem:[#allocation5 + $0x18] sm:$0xf]
    %v791 = vld [vmem:[#allocation5 + $0x34] sm:$0xf]
    %v792 = vld [vmem:[#allocation5 + $0x50] sm:$0xf]
    %v793 = vld [vmem:[#allocation5 + $0x6c] sm:$0xf]
    %v794 = vld [vmem:[#allocation5 + $0x88] sm:$0xf]
    %v795 = vld [vmem:[#allocation5 + $0xa4] sm:$0xf]
    %v796 = vld [vmem:[#allocation5 + $0xc0] sm:$0xf]
    %v797 = vld [vmem:[#allocation5 + $0xdc] sm:$0xf]
    %v798 = vld [vmem:[#allocation5 + $0xf8] sm:$0xf]
    %v799 = vld [vmem:[#allocation5 + $0x114] sm:$0xf]
    %v800 = vld [vmem:[#allocation5 + $0x130] sm:$0xf]
    %v801 = vld [vmem:[#allocation5 + $0x14c] sm:$0xf]
    %v802 = vld [vmem:[#allocation5 + $0x168] sm:$0xf]
    %v803 = vld [vmem:[#allocation5 + $0x184] sm:$0xf]
    %v804 = vld [vmem:[#allocation5 + $0x1a0] sm:$0xf]
    %v805 = vld [vmem:[#allocation5 + $0x1bc] sm:$0xf]
    %v806 = vperm.slane %v89, 2
    %v823 = vunpack.c.l.b16 %v790
    %v824 = vunpack.c.l.b16 %v791
    %v825 = vunpack.c.l.b16 %v792
    %v826 = vunpack.c.l.b16 %v793
    %v827 = vunpack.c.l.b16 %v794
    %v828 = vunpack.c.l.b16 %v795
    %v829 = vunpack.c.l.b16 %v796
    %v830 = vunpack.c.l.b16 %v797
    %v831 = vunpack.c.l.b16 %v798
    %v832 = vunpack.c.l.b16 %v799
    %v833 = vunpack.c.l.b16 %v800
    %v834 = vunpack.c.l.b16 %v801
    %v835 = vunpack.c.l.b16 %v802
    %v836 = vunpack.c.l.b16 %v803
    %v837 = vunpack.c.l.b16 %v804
    %v838 = vunpack.c.l.b16 %v805
    %v839 = vpack.c.b16 %v824, %v823
    %v840 = vpack.c.b16 %v826, %v825
    %v841 = vpack.c.b16 %v828, %v827
    %v842 = vpack.c.b16 %v830, %v829
    %v843 = vpack.c.b16 %v832, %v831
    %v844 = vpack.c.b16 %v834, %v833
    %v845 = vpack.c.b16 %v836, %v835
    %v846 = vpack.c.b16 %v838, %v837
    %855 = vmatpush.bf16.msra.mxu0 %v846
    %856 = vmatpush.bf16.msra.mxu0 %v845
    %857 = vmatpush.bf16.msra.mxu0 %v844
    %858 = vmatpush.bf16.msra.mxu0 %v843
    %859 = vmatpush.bf16.msra.mxu0 %v842
    %860 = vmatpush.bf16.msra.mxu0 %v841
    %861 = vmatpush.bf16.msra.mxu0 %v840
    %862 = vmatpush.bf16.msra.mxu0 %v839
    %863 = vmatmul.bf16.gmra.mxu0 %v789
    %v864 = vpop.f32.mrf.mxu0
    %v865 = vadd.f32 %v806, %v864
    %v866 = vpop.f32.mrf.mxu0
    %v867 = vadd.f32 %v806, %v866
    %868 = vdwg.mxu0
    %v869 = vadd.f32 %v865, %v471
    %v870 = vadd.f32 %v867, %v472
    %871 = vst [vmem:[#allocation10] sm:$0xff] %v869
    %872 = vst [vmem:[#allocation10 + $0x8] sm:$0xff] %v870
    // Predicated region
    $region34: #{tpu_custom_call.1} parent=1 // pred_check
      _
    $region35: #{tpu_custom_call.1} parent=1 // pred_check_branch
      %874 = sbr.rel (0) target = $region37
    $region36: #{tpu_custom_call.1} parent=1 // pred_region
      %876 = vsyncadd [#allocation4], 0
      %s877 = sshll.u32 [#allocation10], 4
      %s878 = int_to_ptr.vmem [resolvable:$true] %s877
      %s879 = sshll.u32 %s4, 4
      %s880 = int_to_ptr.hbm [resolvable:$true] %s879
      %885 = dma.vmem_to_hbm [thread:$0]  %s878, 256, %s880, [#allocation4], 128, 128, 8
    $region37: #{tpu_custom_call.1} parent=1 // pred_fallthru
      _
    // Predicated region
    $region38: #{tpu_custom_call.1} parent=1 // pred_check
      _
    $region39: #{tpu_custom_call.1} parent=1 // pred_check_branch
      %887 = sbr.rel (0) target = $region41
    $region40: #{tpu_custom_call.1} parent=1 // pred_region
      %889 = dma.done [#allocation4], 256
    $region41: #{tpu_custom_call.1} parent=1 // pred_fallthru
      _
    %890 = vsyncpa [#allocation3], 1
    %891 = vsyncpa [#allocation6], 1
    %892 = vsyncpa [#allocation9], 1
    %893 = vsyncpa [#allocation4], 1

</llo_original>
